<compile_context>
chip_gen: v6e
topology: v6e:2x2x1
jax: 0.10.0
libtpu: 0.0.40
codegen_flags: <defaults>
</compile_context>

<pallas_src>
import functools

import jax
import jax.numpy as jnp
from jax.experimental import pallas as pl
from jax.experimental.pallas import tpu as pltpu

N_JOINTS = 21
N_FINGERS = 5
ROWS_IN = N_JOINTS + 1      # 22 = 21 joint rows + 1 velocity row
ROWS_OUT = N_FINGERS + 1    # 6  = 5 pooled fingers + velocity row
# M maps joints 4k+1 .. 4k+4 to finger k (joint 0 = wrist is pooled into no finger).
_FINGER_SLICES = tuple((1 + 4 * k, 5 + 4 * k) for k in range(N_FINGERS))


def fingerpool_kernel(h_ref, w_ref, out_ref):
    """One block of batch elements.

    h_ref   : (Bb, 22, H)   -- 21 joint rows + 1 velocity row, H on lanes
    w_ref   : (1, H)        -- weight of nn.Linear(in_dim, 1, bias=False)
    out_ref : (Bb, 6 * H)   -- lane-flattened [finger0 | ... | finger4 | velocity]
    """
    H = h_ref.shape[-1]
    odt = out_ref.dtype

    h = h_ref[...].astype(jnp.float32)             # (Bb, 22, H)
    core = h[:, :N_JOINTS, :]                      # (Bb, 21, H)
    vel = h[:, N_JOINTS, :]                        # (Bb, H)
    w = w_ref[...].astype(jnp.float32)             # (1, H)

    # score(core) = core @ w^T (1-wide output): VPU multiply + lane (XLU) reduction.
    # keepdims layout (Bb, 21, 1) so alpha broadcasts against core with no relayout.
    s = jnp.sum(core * w[None, :, :], axis=-1, keepdims=True)     # (Bb, 21, 1)

    # softmax over the 21 joints (dim=1 in the torch module), numerically stabilised.
    s = s - jnp.max(s, axis=1, keepdims=True)
    e = jnp.exp(s)                                                # (Bb, 21, 1)
    denom = jnp.sum(e, axis=1, keepdims=True)                     # (Bb, 1, 1)
    alpha = e * pl.reciprocal(denom, approx=True)                 # (Bb, 21, 1), EUP recip

    # dedos[b, k, :] = sum_n M[n, k] * alpha[b, n] * core[b, n, :]; M is a fixed 0/1 buffer,
    # so the contraction folds into static grouped sublane sums (fused with the alpha weight).
    # Each slab is stored at a static, 128-aligned lane offset -> unmasked lane-dense stores.
    for k, (lo, hi) in enumerate(_FINGER_SLICES):
        pooled = jnp.sum(core[:, lo:hi, :] * alpha[:, lo:hi, :], axis=1)   # (Bb, H)
        out_ref[:, k * H:(k + 1) * H] = pooled.astype(odt)
    out_ref[:, N_FINGERS * H:] = vel.astype(odt)


def _batch_block(B, target=256):
    """Pick the batch tile: whole batch for small B, otherwise a large multiple of 8
    (cdiv grid masks the ragged tail), keeping >= 2 grid steps for megacore sharding."""
    if B <= 16:
        return B                                   # full dim satisfies the tiling rule
    half = -(-B // 2)                              # ceil(B / 2)
    half_up = ((half + 7) // 8) * 8                # round up to sublane multiple
    return min(target, half_up)


@functools.partial(jax.jit, static_argnames=())
def fingerpool_forward(h, score_weight):
    """h: (B, 22, H), score_weight: (1, H)  ->  (B, 6*H), matching FingerPool.forward."""
    B, R, H = h.shape
    assert R == ROWS_IN, f"expected {ROWS_IN} rows (21 joints + velocity), got {R}"
    out_dtype = h.dtype

    b_blk = _batch_block(B)
    grid = (pl.cdiv(B, b_blk),)                    # ragged last block is masked, never b_blk=1

    itemsize = jnp.dtype(h.dtype).itemsize
    blk_bytes = b_blk * (ROWS_IN * H + ROWS_OUT * H) * itemsize
    vmem_limit = int(min(max(4 * blk_bytes + (1 << 20), 16 << 20), 48 << 20))

    cost = pl.CostEstimate(
        flops=int(B * (2 * N_JOINTS * H + 2 * (N_JOINTS - 1) * H + 4 * N_JOINTS)),
        transcendentals=int(B * N_JOINTS),
        bytes_accessed=int(B * (ROWS_IN * H + ROWS_OUT * H) * itemsize + H * 4),
    )

    return pl.pallas_call(
        fingerpool_kernel,
        grid=grid,
        in_specs=[
            pl.BlockSpec((b_blk, ROWS_IN, H), lambda b: (b, 0, 0)),
            pl.BlockSpec((1, H), lambda b: (0, 0)),
        ],
        out_specs=pl.BlockSpec((b_blk, ROWS_OUT * H), lambda b: (b, 0)),
        out_shape=jax.ShapeDtypeStruct((B, ROWS_OUT * H), out_dtype),
        compiler_params=pltpu.CompilerParams(
            dimension_semantics=("parallel",),
            vmem_limit_bytes=vmem_limit,
        ),
        cost_estimate=cost,
    )(h, score_weight)


# ------------------------- pure-JAX reference (explicit M buffer) -------------------------
def build_M():
    M = jnp.zeros((N_JOINTS, N_FINGERS), jnp.float32)
    for k, idx in enumerate([range(1, 5), range(5, 9), range(9, 13),
                             range(13, 17), range(17, 21)]):
        M = M.at[jnp.array(list(idx)), k].set(1.0)
    return M


def fingerpool_reference(h, score_weight, M):
    h = h.astype(jnp.float32)
    core, vel = h[:, :N_JOINTS], h[:, N_JOINTS:N_JOINTS + 1]
    s = jnp.einsum('bnh,h->bn', core, score_weight[0].astype(jnp.float32))[..., None]
    alpha = jax.nn.softmax(s, axis=1)
    dedos = jnp.einsum('bnh,nk->bkh', alpha * core, M)
    out = jnp.concatenate([dedos, vel], axis=1)
    return out.reshape(h.shape[0], -1)


if __name__ == "__main__":
    key = jax.random.PRNGKey(0)
    B, in_dim = 2, 128            # in_dim on lanes -> lane-dense vregs / stores
    k_h, k_w = jax.random.split(key)

    h = jax.random.normal(k_h, (B, ROWS_IN, in_dim), jnp.float32)
    # nn.Linear(in_dim, 1, bias=False) weight (uniform init, scaled)
    score_weight = (jax.random.uniform(k_w, (1, in_dim), jnp.float32, -1.0, 1.0)
                    / jnp.sqrt(in_dim))

    out = fingerpool_forward(h, score_weight)
    jax.block_until_ready(out)

    ref = fingerpool_reference(h, score_weight, build_M())
    assert out.shape == (B, ROWS_OUT * in_dim)
    # tolerance loosened slightly for the EUP approx reciprocal in the softmax denominator
    assert jnp.allclose(out, ref, atol=2e-3, rtol=2e-3), float(jnp.max(jnp.abs(out - ref)))
    print("KERNEL_OK")
</pallas_src>

<mosaic_0001>
module attributes {stable_mosaic.version = 11 : i64} {
  func.func @fingerpool_kernel(%arg0: i32, %arg1: memref<2x22x128xf32, #tpu.memory_space<vmem>>, %arg2: memref<1x128xf32, #tpu.memory_space<vmem>>, %arg3: memref<2x768xf32, #tpu.memory_space<vmem>>) attributes {dimension_semantics = [#tpu.dimension_semantics<parallel>], iteration_bounds = array<i64: 1>, scalar_prefetch = 0 : i64, scratch_operands = 0 : i64, tpu.core_type = #tpu.core_type<tc>, window_params = [{transform_indices = @transform_0, window_bounds = array<i64: 2, 22, 128>}, {pipeline_mode = #tpu.pipeline_mode<synchronous>, transform_indices = @transform_1, window_bounds = array<i64: 1, 128>}, {transform_indices = @transform_2, window_bounds = array<i64: 2, 768>}]} {
    %c0 = arith.constant 0 : index
    %c0_0 = arith.constant 0 : index
    %c0_1 = arith.constant 0 : index
    %0 = vector.load %arg1[%c0, %c0_0, %c0_1] : memref<2x22x128xf32, #tpu.memory_space<vmem>>, vector<2x22x128xf32>
    %1 = vector.extract_strided_slice %0 {offsets = [0, 0, 0], sizes = [2, 21, 128], strides = [1, 1, 1]} : vector<2x22x128xf32> to vector<2x21x128xf32>
    %2 = vector.extract_strided_slice %0 {offsets = [0, 21, 0], sizes = [2, 1, 128], strides = [1, 1, 1]} : vector<2x22x128xf32> to vector<2x1x128xf32>
    %3 = vector.shape_cast %2 : vector<2x1x128xf32> to vector<2x128xf32>
    %c0_2 = arith.constant 0 : index
    %c0_3 = arith.constant 0 : index
    %4 = vector.load %arg2[%c0_2, %c0_3] : memref<1x128xf32, #tpu.memory_space<vmem>>, vector<1x128xf32>
    %5 = vector.shape_cast %4 : vector<1x128xf32> to vector<1x1x128xf32>
    %6 = vector.broadcast %5 : vector<1x1x128xf32> to vector<2x21x128xf32>
    %7 = arith.mulf %1, %6 : vector<2x21x128xf32>
    %cst = arith.constant dense<0.000000e+00> : vector<2x21xf32>
    %8 = vector.multi_reduction <add>, %7, %cst [2] : vector<2x21x128xf32> to vector<2x21xf32>
    %9 = vector.shape_cast %8 : vector<2x21xf32> to vector<2x21x1xf32>
    %cst_4 = arith.constant dense<0xFF800000> : vector<2x1xf32>
    %10 = vector.multi_reduction <maximumf>, %9, %cst_4 [1] : vector<2x21x1xf32> to vector<2x1xf32>
    %11 = vector.shape_cast %10 : vector<2x1xf32> to vector<2x1x1xf32>
    %12 = vector.broadcast %11 : vector<2x1x1xf32> to vector<2x21x1xf32>
    %13 = arith.subf %9, %12 : vector<2x21x1xf32>
    %14 = math.exp %13 : vector<2x21x1xf32>
    %cst_5 = arith.constant dense<0.000000e+00> : vector<2x1xf32>
    %15 = vector.multi_reduction <add>, %14, %cst_5 [1] : vector<2x21x1xf32> to vector<2x1xf32>
    %16 = vector.shape_cast %15 : vector<2x1xf32> to vector<2x1x1xf32>
    %17 = tpu.reciprocal %16 {approx = true} : vector<2x1x1xf32> -> vector<2x1x1xf32>
    %18 = vector.broadcast %17 : vector<2x1x1xf32> to vector<2x21x1xf32>
    %19 = arith.mulf %14, %18 : vector<2x21x1xf32>
    %20 = vector.extract_strided_slice %1 {offsets = [0, 1, 0], sizes = [2, 4, 128], strides = [1, 1, 1]} : vector<2x21x128xf32> to vector<2x4x128xf32>
    %21 = vector.extract_strided_slice %19 {offsets = [0, 1, 0], sizes = [2, 4, 1], strides = [1, 1, 1]} : vector<2x21x1xf32> to vector<2x4x1xf32>
    %22 = vector.broadcast %21 : vector<2x4x1xf32> to vector<2x4x128xf32>
    %23 = arith.mulf %20, %22 : vector<2x4x128xf32>
    %cst_6 = arith.constant dense<0.000000e+00> : vector<2x128xf32>
    %24 = vector.multi_reduction <add>, %23, %cst_6 [1] : vector<2x4x128xf32> to vector<2x128xf32>
    %c0_7 = arith.constant 0 : index
    %c0_8 = arith.constant 0 : index
    %25 = vector.load %arg3[%c0_7, %c0_8] : memref<2x768xf32, #tpu.memory_space<vmem>>, vector<2x128xf32>
    tpu.vector_store %arg3[%c0_7, %c0_8], %24 {strides = array<i32>} : memref<2x768xf32, #tpu.memory_space<vmem>>, vector<2x128xf32>,
    %26 = vector.extract_strided_slice %1 {offsets = [0, 5, 0], sizes = [2, 4, 128], strides = [1, 1, 1]} : vector<2x21x128xf32> to vector<2x4x128xf32>
    %27 = vector.extract_strided_slice %19 {offsets = [0, 5, 0], sizes = [2, 4, 1], strides = [1, 1, 1]} : vector<2x21x1xf32> to vector<2x4x1xf32>
    %28 = vector.broadcast %27 : vector<2x4x1xf32> to vector<2x4x128xf32>
    %29 = arith.mulf %26, %28 : vector<2x4x128xf32>
    %cst_9 = arith.constant dense<0.000000e+00> : vector<2x128xf32>
    %30 = vector.multi_reduction <add>, %29, %cst_9 [1] : vector<2x4x128xf32> to vector<2x128xf32>
    %c0_10 = arith.constant 0 : index
    %c128 = arith.constant 128 : index
    %31 = vector.load %arg3[%c0_10, %c128] : memref<2x768xf32, #tpu.memory_space<vmem>>, vector<2x128xf32>
    tpu.vector_store %arg3[%c0_10, %c128], %30 {strides = array<i32>} : memref<2x768xf32, #tpu.memory_space<vmem>>, vector<2x128xf32>,
    %32 = vector.extract_strided_slice %1 {offsets = [0, 9, 0], sizes = [2, 4, 128], strides = [1, 1, 1]} : vector<2x21x128xf32> to vector<2x4x128xf32>
    %33 = vector.extract_strided_slice %19 {offsets = [0, 9, 0], sizes = [2, 4, 1], strides = [1, 1, 1]} : vector<2x21x1xf32> to vector<2x4x1xf32>
    %34 = vector.broadcast %33 : vector<2x4x1xf32> to vector<2x4x128xf32>
    %35 = arith.mulf %32, %34 : vector<2x4x128xf32>
    %cst_11 = arith.constant dense<0.000000e+00> : vector<2x128xf32>
    %36 = vector.multi_reduction <add>, %35, %cst_11 [1] : vector<2x4x128xf32> to vector<2x128xf32>
    %c0_12 = arith.constant 0 : index
    %c256 = arith.constant 256 : index
    %37 = vector.load %arg3[%c0_12, %c256] : memref<2x768xf32, #tpu.memory_space<vmem>>, vector<2x128xf32>
    tpu.vector_store %arg3[%c0_12, %c256], %36 {strides = array<i32>} : memref<2x768xf32, #tpu.memory_space<vmem>>, vector<2x128xf32>,
    %38 = vector.extract_strided_slice %1 {offsets = [0, 13, 0], sizes = [2, 4, 128], strides = [1, 1, 1]} : vector<2x21x128xf32> to vector<2x4x128xf32>
    %39 = vector.extract_strided_slice %19 {offsets = [0, 13, 0], sizes = [2, 4, 1], strides = [1, 1, 1]} : vector<2x21x1xf32> to vector<2x4x1xf32>
    %40 = vector.broadcast %39 : vector<2x4x1xf32> to vector<2x4x128xf32>
    %41 = arith.mulf %38, %40 : vector<2x4x128xf32>
    %cst_13 = arith.constant dense<0.000000e+00> : vector<2x128xf32>
    %42 = vector.multi_reduction <add>, %41, %cst_13 [1] : vector<2x4x128xf32> to vector<2x128xf32>
    %c0_14 = arith.constant 0 : index
    %c384 = arith.constant 384 : index
    %43 = vector.load %arg3[%c0_14, %c384] : memref<2x768xf32, #tpu.memory_space<vmem>>, vector<2x128xf32>
    tpu.vector_store %arg3[%c0_14, %c384], %42 {strides = array<i32>} : memref<2x768xf32, #tpu.memory_space<vmem>>, vector<2x128xf32>,
    %44 = vector.extract_strided_slice %1 {offsets = [0, 17, 0], sizes = [2, 4, 128], strides = [1, 1, 1]} : vector<2x21x128xf32> to vector<2x4x128xf32>
    %45 = vector.extract_strided_slice %19 {offsets = [0, 17, 0], sizes = [2, 4, 1], strides = [1, 1, 1]} : vector<2x21x1xf32> to vector<2x4x1xf32>
    %46 = vector.broadcast %45 : vector<2x4x1xf32> to vector<2x4x128xf32>
    %47 = arith.mulf %44, %46 : vector<2x4x128xf32>
    %cst_15 = arith.constant dense<0.000000e+00> : vector<2x128xf32>
    %48 = vector.multi_reduction <add>, %47, %cst_15 [1] : vector<2x4x128xf32> to vector<2x128xf32>
    %c0_16 = arith.constant 0 : index
    %c512 = arith.constant 512 : index
    %49 = vector.load %arg3[%c0_16, %c512] : memref<2x768xf32, #tpu.memory_space<vmem>>, vector<2x128xf32>
    tpu.vector_store %arg3[%c0_16, %c512], %48 {strides = array<i32>} : memref<2x768xf32, #tpu.memory_space<vmem>>, vector<2x128xf32>,
    %c0_17 = arith.constant 0 : index
    %c640 = arith.constant 640 : index
    %50 = vector.load %arg3[%c0_17, %c640] : memref<2x768xf32, #tpu.memory_space<vmem>>, vector<2x128xf32>
    tpu.vector_store %arg3[%c0_17, %c640], %3 {strides = array<i32>} : memref<2x768xf32, #tpu.memory_space<vmem>>, vector<2x128xf32>,
    return
  }
  func.func @transform_0(%arg0: i32) -> (i32, i32, i32) {
    %c0_i32 = arith.constant 0 : i32
    %c0_i32_0 = arith.constant 0 : i32
    %c0_i32_1 = arith.constant 0 : i32
    return %arg0, %c0_i32, %c0_i32_0 : i32, i32, i32
  }
  func.func @transform_1(%arg0: i32) -> (i32, i32) {
    %c0_i32 = arith.constant 0 : i32
    %c0_i32_0 = arith.constant 0 : i32
    %c0_i32_1 = arith.constant 0 : i32
    return %c0_i32, %c0_i32_0 : i32, i32
  }
  func.func @transform_2(%arg0: i32) -> (i32, i32) {
    %c0_i32 = arith.constant 0 : i32
    %c0_i32_0 = arith.constant 0 : i32
    return %arg0, %c0_i32 : i32, i32
  }
}

</mosaic_0001>

<llo_original>
// kernel: fingerpool_forward.1
$region0: #{fingerpool_forward.1}
  #allocation0 [shape = 'u32[]', space=smem, size = 0x4, offset = 0x4, fixed_abs, tag = 'smem constant byte address 0x4 - core index']
  #allocation1 [shape = 'u32[144,128]{1,0:T(1,128)}', space=vmem, size = 0x12000, scoped, tag = 'internal scratch']
  %s0 = inlined_call_operand.vmem [shape: f32[2,22,128], index: 0, kind: input, shape index: {}]
  %s1 = inlined_call_operand.vmem [shape: f32[1,128], index: 1, kind: input, shape index: {}]
  %s2 = inlined_call_operand.hbm [shape: f32[2,768], index: 2, kind: output, shape index: {}]
  %s3 = sld [smem:[#allocation0]]
  $region18: #{fingerpool_forward.1} parent=0
    _
  %s5 = ssub.s32 1, %s3
  %s6 = scalar_select 0, %s5, %s3
  $region1: #{fingerpool_forward.1} parent=0
    #allocation2 [shape = 'u8[6144]{0}', space=vmem, size = 0x1800, scoped, tag = 'output window, operand 0, single buffered']
    #allocation3 [shape = 's32[1]{0}', space=sflag, size = 0x4, scoped, tag = 'scoped memory for fingerpool_forward.1']
    %7 = vsyncpa [#allocation3], 0
    // Predicated region
    $region2: #{fingerpool_forward.1} parent=1 // pred_check
      _
    $region3: #{fingerpool_forward.1} parent=1 // pred_check_branch
      %9 = sbr.rel (0) target = $region5
    $region4: #{fingerpool_forward.1} parent=1 // pred_region
      _
    $region5: #{fingerpool_forward.1} parent=1 // pred_fallthru
      _
    // Predicated region
    $region6: #{fingerpool_forward.1} parent=1 // pred_check
      _
    $region7: #{fingerpool_forward.1} parent=1 // pred_check_branch
      %11 = sbr.rel (0) target = $region9
    $region8: #{fingerpool_forward.1} parent=1 // pred_region
      _
    $region9: #{fingerpool_forward.1} parent=1 // pred_fallthru
      _
    %v12 = vld [vmem:[%s0] sm:$0xff]
    %v13 = vld [vmem:[%s0 + $0x8] sm:$0xff]
    %v14 = vld [vmem:[%s0 + $0x10] sm:$0x3f]
    %v15 = vld [vmem:[%s0 + $0x18] sm:$0xff]
    %v16 = vld [vmem:[%s0 + $0x20] sm:$0xff]
    %v17 = vld [vmem:[%s0 + $0x28] sm:$0x3f]
    %v18 = vld [vmem:[%s1] sm:$0x1]
    %v20 = vlaneseq
    %v21 = vshrl.u32 %v20, 7
    %v22 = vsub.s32 0, %v21
    %v23 = vrot.slane %v18, %v22
    %v25 = vmul.f32 %v12, %v23
    %v26 = vmul.f32 %v13, %v23
    %v27 = vmul.f32 %v14, %v23
    %v28 = vmul.f32 %v15, %v23
    %v29 = vmul.f32 %v16, %v23
    %v30 = vmul.f32 %v17, %v23
    %31 = vadd.xlane.f32.xlu0 %v25
    %v32 = vpop.xlane.xlu0 %31
    %33 = vadd.xlane.f32.xlu0 %v26
    %v34 = vpop.xlane.xlu0 %33
    %vm35 = vcmask 1044480
    %v36 = vsel %vm35, %v27, 0.0
    %37 = vadd.xlane.f32.xlu0 %v36
    %v38 = vpop.xlane.xlu0 %37
    %39 = vadd.xlane.f32.xlu0 %v28
    %v40 = vpop.xlane.xlu0 %39
    %41 = vadd.xlane.f32.xlu0 %v29
    %v42 = vpop.xlane.xlu0 %41
    %v43 = vsel %vm35, %v30, 0.0
    %44 = vadd.xlane.f32.xlu0 %v43
    %v45 = vpop.xlane.xlu0 %44
    %v46 = vsel %vm35, %v38, -inf
    %v47 = vmax.f32 %v32, %v46
    %v48 = vmax.f32 %v47, %v34
    %v49 = vrot.slane %v48, 4
    %v50 = vmax.f32 %v48, %v49
    %v51 = vrot.slane %v50, 2
    %v52 = vmax.f32 %v50, %v51
    %v53 = vrot.slane %v52, 1
    %v54 = vmax.f32 %v52, %v53
    %v55 = vsel %vm35, %v45, -inf
    %v56 = vmax.f32 %v40, %v55
    %v57 = vmax.f32 %v56, %v42
    %v58 = vrot.slane %v57, 4
    %v59 = vmax.f32 %v57, %v58
    %v60 = vrot.slane %v59, 2
    %v61 = vmax.f32 %v59, %v60
    %v62 = vrot.slane %v61, 1
    %v63 = vmax.f32 %v61, %v62
    %v64 = vsub.f32 %v32, %v54
    %v65 = vsub.f32 %v34, %v54
    %v66 = vsub.f32 %v38, %v54
    %v67 = vsub.f32 %v40, %v63
    %v68 = vsub.f32 %v42, %v63
    %v69 = vsub.f32 %v45, %v63
    %v70 = vmul.f32 %v64, 1.442695
    %v71 = vpow.pop %v70
    %v72 = vmul.f32 %v65, 1.442695
    %v73 = vpow.pop %v72
    %v74 = vmul.f32 %v66, 1.442695
    %v75 = vpow.pop %v74
    %v76 = vmul.f32 %v67, 1.442695
    %v77 = vpow.pop %v76
    %v78 = vmul.f32 %v68, 1.442695
    %v79 = vpow.pop %v78
    %v80 = vmul.f32 %v69, 1.442695
    %v81 = vpow.pop %v80
    %v82 = vadd.f32 %v71, %v73
    %v83 = vsel %vm35, %v75, 0.0
    %v84 = vadd.f32 %v82, %v83
    %v85 = vrot.slane %v84, 4
    %v86 = vadd.f32 %v84, %v85
    %v87 = vrot.slane %v86, 2
    %v88 = vadd.f32 %v86, %v87
    %v89 = vrot.slane %v88, 1
    %v90 = vadd.f32 %v88, %v89
    %v91 = vadd.f32 %v77, %v79
    %v92 = vsel %vm35, %v81, 0.0
    %v93 = vadd.f32 %v91, %v92
    %v94 = vrot.slane %v93, 4
    %v95 = vadd.f32 %v93, %v94
    %v96 = vrot.slane %v95, 2
    %v97 = vadd.f32 %v95, %v96
    %v98 = vrot.slane %v97, 1
    %v99 = vadd.f32 %v97, %v98
    %v100 = vrcp.pop %v90
    %v101 = vrcp.pop %v99
    %v102 = vmul.f32 %v71, %v100
    %v103 = vmul.f32 %v73, %v100
    %v104 = vmul.f32 %v75, %v100
    %v105 = vmul.f32 %v77, %v101
    %v106 = vmul.f32 %v79, %v101
    %v107 = vmul.f32 %v81, %v101
    %v108 = vmul.f32 %v12, %v102
    %v109 = vmul.f32 %v15, %v105
    %v112 = vrot.slane %v108, 1
    %v113 = vrot.slane %v109, 1
    %vm116 = vcmask 1043456
    %v117 = vsel %vm116, %v112, 0.0
    %v118 = vrot.slane %v117, 4
    %v119 = vadd.f32 %v117, %v118
    %v120 = vrot.slane %v119, 2
    %v121 = vadd.f32 %v119, %v120
    %v122 = vrot.slane %v121, 1
    %v123 = vadd.f32 %v121, %v122
    %v124 = vsel %vm116, %v113, 0.0
    %v125 = vrot.slane %v124, 4
    %v126 = vadd.f32 %v124, %v125
    %v127 = vrot.slane %v126, 2
    %v128 = vadd.f32 %v126, %v127
    %v129 = vrot.slane %v128, 1
    %v130 = vadd.f32 %v128, %v129
    %v134 = vunpack.c.l.s4 1983009808
    %v135 = vunpack.c.0.s8 %v134
    %v136 = vlaneseq
    %v137 = vshrl.u32 %v136, 7
    %v138 = vsub.s32 %v135, %v137
    %v139 = vrot.slane %v123, %v138
    %v141 = vunpack.c.l.s4 1983009808
    %v142 = vunpack.c.0.s8 %v141
    %v143 = vlaneseq
    %v144 = vshrl.u32 %v143, 7
    %v145 = vsub.s32 %v142, %v144
    %v146 = vrot.slane %v130, %v145
    %vm147 = vcmask 1044484
    %v148 = vsel %vm147, %v139, %v139
    %vm149 = vcmask 1046534
    %v150 = vsel %vm149, %v139, %v148
    %v151 = vrot.slane %v146, 7
    %vm152 = vcmask 1041409
    %v153 = vsel %vm152, %v151, %v150
    %vm154 = vcmask 1043459
    %v155 = vsel %vm154, %v151, %v153
    %vm156 = vcmask 1045509
    %v157 = vsel %vm156, %v151, %v155
    %vm158 = vcmask 1047559
    %v159 = vsel %vm158, %v151, %v157
    %161 = vst [vmem:[#allocation2] sm:$0x3] %v159
    %v162 = vmul.f32 %v13, %v103
    %v163 = vmul.f32 %v16, %v106
    %vm166 = vcmask 1042432
    %v167 = vrot.slane %v108, 5
    %v168 = vrot.slane %v162, 5
    %v169 = vsel %vm166, %v167, %v168
    %v170 = vrot.slane %v109, 5
    %v171 = vrot.slane %v163, 5
    %v172 = vsel %vm166, %v170, %v171
    %v175 = vsel %vm116, %v169, 0.0
    %v176 = vrot.slane %v175, 4
    %v177 = vadd.f32 %v175, %v176
    %v178 = vrot.slane %v177, 2
    %v179 = vadd.f32 %v177, %v178
    %v180 = vrot.slane %v179, 1
    %v181 = vadd.f32 %v179, %v180
    %v182 = vsel %vm116, %v172, 0.0
    %v183 = vrot.slane %v182, 4
    %v184 = vadd.f32 %v182, %v183
    %v185 = vrot.slane %v184, 2
    %v186 = vadd.f32 %v184, %v185
    %v187 = vrot.slane %v186, 1
    %v188 = vadd.f32 %v186, %v187
    %v192 = vunpack.c.l.s4 1983009808
    %v193 = vunpack.c.0.s8 %v192
    %v194 = vlaneseq
    %v195 = vshrl.u32 %v194, 7
    %v196 = vsub.s32 %v193, %v195
    %v197 = vrot.slane %v181, %v196
    %v199 = vunpack.c.l.s4 1983009808
    %v200 = vunpack.c.0.s8 %v199
    %v201 = vlaneseq
    %v202 = vshrl.u32 %v201, 7
    %v203 = vsub.s32 %v200, %v202
    %v204 = vrot.slane %v188, %v203
    %v205 = vsel %vm147, %v197, %v197
    %v206 = vsel %vm149, %v197, %v205
    %v207 = vrot.slane %v204, 7
    %v208 = vsel %vm152, %v207, %v206
    %v209 = vsel %vm154, %v207, %v208
    %v210 = vsel %vm156, %v207, %v209
    %v211 = vsel %vm158, %v207, %v210
    %213 = vst [vmem:[#allocation2 + $0x2] sm:$0x3] %v211
    %v214 = vrot.slane %v162, 1
    %v215 = vrot.slane %v163, 1
    %v218 = vsel %vm116, %v214, 0.0
    %v219 = vrot.slane %v218, 4
    %v220 = vadd.f32 %v218, %v219
    %v221 = vrot.slane %v220, 2
    %v222 = vadd.f32 %v220, %v221
    %v223 = vrot.slane %v222, 1
    %v224 = vadd.f32 %v222, %v223
    %v225 = vsel %vm116, %v215, 0.0
    %v226 = vrot.slane %v225, 4
    %v227 = vadd.f32 %v225, %v226
    %v228 = vrot.slane %v227, 2
    %v229 = vadd.f32 %v227, %v228
    %v230 = vrot.slane %v229, 1
    %v231 = vadd.f32 %v229, %v230
    %v235 = vunpack.c.l.s4 1983009808
    %v236 = vunpack.c.0.s8 %v235
    %v237 = vlaneseq
    %v238 = vshrl.u32 %v237, 7
    %v239 = vsub.s32 %v236, %v238
    %v240 = vrot.slane %v224, %v239
    %v242 = vunpack.c.l.s4 1983009808
    %v243 = vunpack.c.0.s8 %v242
    %v244 = vlaneseq
    %v245 = vshrl.u32 %v244, 7
    %v246 = vsub.s32 %v243, %v245
    %v247 = vrot.slane %v231, %v246
    %v248 = vsel %vm147, %v240, %v240
    %v249 = vsel %vm149, %v240, %v248
    %v250 = vrot.slane %v247, 7
    %v251 = vsel %vm152, %v250, %v249
    %v252 = vsel %vm154, %v250, %v251
    %v253 = vsel %vm156, %v250, %v252
    %v254 = vsel %vm158, %v250, %v253
    %256 = vst [vmem:[#allocation2 + $0x4] sm:$0x3] %v254
    %v257 = vmul.f32 %v14, %v104
    %v258 = vmul.f32 %v17, %v107
    %v261 = vrot.slane %v257, 5
    %v262 = vsel %vm166, %v168, %v261
    %v263 = vrot.slane %v258, 5
    %v264 = vsel %vm166, %v171, %v263
    %v267 = vsel %vm116, %v262, 0.0
    %v268 = vrot.slane %v267, 4
    %v269 = vadd.f32 %v267, %v268
    %v270 = vrot.slane %v269, 2
    %v271 = vadd.f32 %v269, %v270
    %v272 = vrot.slane %v271, 1
    %v273 = vadd.f32 %v271, %v272
    %v274 = vsel %vm116, %v264, 0.0
    %v275 = vrot.slane %v274, 4
    %v276 = vadd.f32 %v274, %v275
    %v277 = vrot.slane %v276, 2
    %v278 = vadd.f32 %v276, %v277
    %v279 = vrot.slane %v278, 1
    %v280 = vadd.f32 %v278, %v279
    %v284 = vunpack.c.l.s4 1983009808
    %v285 = vunpack.c.0.s8 %v284
    %v286 = vlaneseq
    %v287 = vshrl.u32 %v286, 7
    %v288 = vsub.s32 %v285, %v287
    %v289 = vrot.slane %v273, %v288
    %v291 = vunpack.c.l.s4 1983009808
    %v292 = vunpack.c.0.s8 %v291
    %v293 = vlaneseq
    %v294 = vshrl.u32 %v293, 7
    %v295 = vsub.s32 %v292, %v294
    %v296 = vrot.slane %v280, %v295
    %v297 = vsel %vm147, %v289, %v289
    %v298 = vsel %vm149, %v289, %v297
    %v299 = vrot.slane %v296, 7
    %v300 = vsel %vm152, %v299, %v298
    %v301 = vsel %vm154, %v299, %v300
    %v302 = vsel %vm156, %v299, %v301
    %v303 = vsel %vm158, %v299, %v302
    %305 = vst [vmem:[#allocation2 + $0x6] sm:$0x3] %v303
    %v306 = vrot.slane %v257, 1
    %v307 = vrot.slane %v258, 1
    %v310 = vsel %vm116, %v306, 0.0
    %v311 = vrot.slane %v310, 4
    %v312 = vadd.f32 %v310, %v311
    %v313 = vrot.slane %v312, 2
    %v314 = vadd.f32 %v312, %v313
    %v315 = vrot.slane %v314, 1
    %v316 = vadd.f32 %v314, %v315
    %v317 = vsel %vm116, %v307, 0.0
    %v318 = vrot.slane %v317, 4
    %v319 = vadd.f32 %v317, %v318
    %v320 = vrot.slane %v319, 2
    %v321 = vadd.f32 %v319, %v320
    %v322 = vrot.slane %v321, 1
    %v323 = vadd.f32 %v321, %v322
    %v327 = vunpack.c.l.s4 1983009808
    %v328 = vunpack.c.0.s8 %v327
    %v329 = vlaneseq
    %v330 = vshrl.u32 %v329, 7
    %v331 = vsub.s32 %v328, %v330
    %v332 = vrot.slane %v316, %v331
    %v334 = vunpack.c.l.s4 1983009808
    %v335 = vunpack.c.0.s8 %v334
    %v336 = vlaneseq
    %v337 = vshrl.u32 %v336, 7
    %v338 = vsub.s32 %v335, %v337
    %v339 = vrot.slane %v323, %v338
    %v340 = vsel %vm147, %v332, %v332
    %v341 = vsel %vm149, %v332, %v340
    %v342 = vrot.slane %v339, 7
    %v343 = vsel %vm152, %v342, %v341
    %v344 = vsel %vm154, %v342, %v343
    %v345 = vsel %vm156, %v342, %v344
    %v346 = vsel %vm158, %v342, %v345
    %348 = vst [vmem:[#allocation2 + $0x8] sm:$0x3] %v346
    %v351 = vcombine.high %v14, %v14
    %v353 = vunpack.c.l.s4 1983009808
    %v354 = vunpack.c.0.s8 %v353
    %v355 = vlaneseq
    %v356 = vshrl.u32 %v355, 7
    %v357 = vsub.s32 %v354, %v356
    %v358 = vrot.slane %v351, %v357
    %v359 = vcombine.high %v17, %v17
    %v361 = vunpack.c.l.s4 1983009808
    %v362 = vunpack.c.0.s8 %v361
    %v363 = vlaneseq
    %v364 = vshrl.u32 %v363, 7
    %v365 = vsub.s32 %v362, %v364
    %v366 = vrot.slane %v359, %v365
    %v367 = vrot.slane %v358, 1
    %v368 = vsel %vm147, %v367, %v367
    %v369 = vsel %vm149, %v367, %v368
    %v370 = vsel %vm152, %v366, %v369
    %v371 = vsel %vm154, %v366, %v370
    %v372 = vsel %vm156, %v366, %v371
    %v373 = vsel %vm158, %v366, %v372
    %375 = vst [vmem:[#allocation2 + $0xa] sm:$0x3] %v373
    // Predicated region
    $region10: #{fingerpool_forward.1} parent=1 // pred_check
      _
    $region11: #{fingerpool_forward.1} parent=1 // pred_check_branch
      %377 = sbr.rel (0) target = $region13
    $region12: #{fingerpool_forward.1} parent=1 // pred_region
      %s379 = ssub.s32 192, 192
      %380 = vsyncadd [#allocation3], %s379
      %s382 = sshll.u32 [#allocation2], 4
      %s383 = int_to_ptr.vmem [resolvable:$true] %s382
      %385 = dma.vmem_to_hbm [thread:$0]  %s383, 192, %s2, [#allocation3]
    $region13: #{fingerpool_forward.1} parent=1 // pred_fallthru
      _
    // Predicated region
    $region14: #{fingerpool_forward.1} parent=1 // pred_check
      _
    $region15: #{fingerpool_forward.1} parent=1 // pred_check_branch
      %387 = sbr.rel (0) target = $region17
    $region16: #{fingerpool_forward.1} parent=1 // pred_region
      %388 = dma.done [#allocation3], 192
    $region17: #{fingerpool_forward.1} parent=1 // pred_fallthru
      _
    %389 = vsyncpa [#allocation3], 1

</llo_original>
